<compile_context>
chip_gen: v5e
topology: v5e:2x2
jax: 0.10.0
libtpu: 0.0.40
codegen_flags: <defaults>
</compile_context>

<pallas_src>
import math

import jax
import jax.numpy as jnp
from jax.experimental import pallas as pl
from jax.experimental.pallas import tpu as pltpu


def _linvar_kernel(x_ref, mu_t_ref, sigma_t_ref, eps_ref, z_ref):
    # x_ref       : (batch, in_dim)
    # mu_t_ref    : (in_dim, tile_cols)  -- w_mu tiled MC_TILE times (grid-invariant)
    # sigma_t_ref : (in_dim, tile_cols)  -- softplus(w_p) tiled     (grid-invariant)
    # eps_ref     : (in_dim, tile_cols)  -- this step's MC noise (col = m*out_dim + o)
    # z_ref       : (batch, tile_cols)   -- lane-dense output slab
    w = mu_t_ref[...] + sigma_t_ref[...] * eps_ref[...]         # reparameterized weights
    z_ref[...] = jnp.dot(x_ref[...], w,
                         preferred_element_type=jnp.float32)    # one wide MXU matmul


def _choose_mc_tile(mc_num, in_dim, out_dim, batch,
                    lane=128, min_tiles=2, vmem_budget_bytes=8 * 1024 * 1024):
    """Pick MC_TILE so MC_TILE*out_dim is a multiple of 128, the grid has >= min_tiles
    steps when possible (v7x megacore), and the double-buffered working set stays
    within a conservative VMEM budget (v7x has only 64 MiB physical)."""
    m0 = lane // math.gcd(out_dim, lane)        # smallest MC tile giving 128-aligned cols
    n_tiles = min_tiles
    while True:
        mc_tile = max(m0, -(-mc_num // (n_tiles * m0)) * m0)    # ceil to multiple of m0
        tile_cols = mc_tile * out_dim
        vmem_bytes = 4 * (2 * in_dim * tile_cols     # eps block (double-buffered)
                          + 2 * batch * tile_cols    # out block (double-buffered)
                          + 2 * in_dim * tile_cols   # mu_t + sigma_t (resident)
                          + batch * in_dim)          # x (resident)
        if vmem_bytes <= vmem_budget_bytes or mc_tile == m0:
            break
        n_tiles *= 2
    n_tiles = -(-mc_num // mc_tile)
    return mc_tile, n_tiles


def linear_variational_forward(x, w_mu, w_p, eps):
    """x: (batch, in_dim) f32; w_mu, w_p: (in_dim, out_dim) f32;
    eps: (in_dim, mc_num, out_dim) f32 standard-normal noise.
    Returns (z, w_mu, w_p) with z: (batch, out_dim, mc_num) (PyTorch layout)."""
    batch, in_dim = x.shape
    out_dim = w_mu.shape[1]
    mc_num = eps.shape[1]

    # Hoisted: softplus computed once (XLA), not once per MC sample.
    sigma = jax.nn.softplus(w_p)                                  # (in_dim, out_dim)

    mc_tile, n_tiles = _choose_mc_tile(mc_num, in_dim, out_dim, batch)
    tile_cols = mc_tile * out_dim
    mc_pad = mc_tile * n_tiles

    # eps laid out lane-dense: (in_dim, mc*out_dim), column = m*out_dim + o.
    eps2d = eps.reshape(in_dim, mc_num * out_dim)
    pad_cols = (mc_pad - mc_num) * out_dim
    if pad_cols:
        eps2d = jnp.pad(eps2d, ((0, 0), (0, pad_cols)))           # padded MC samples -> sliced off

    # mu / sigma tiled once to one MC-tile width; their blocks are grid-invariant.
    mu_t = jnp.tile(w_mu, (1, mc_tile))                           # (in_dim, tile_cols)
    sigma_t = jnp.tile(sigma, (1, mc_tile))                       # (in_dim, tile_cols)

    cost = pl.CostEstimate(
        flops=2 * batch * in_dim * mc_pad * out_dim,
        transcendentals=0,
        bytes_accessed=4 * (batch * in_dim + 2 * in_dim * tile_cols
                            + in_dim * mc_pad * out_dim + batch * mc_pad * out_dim),
    )

    z2d = pl.pallas_call(
        _linvar_kernel,
        out_shape=jax.ShapeDtypeStruct((batch, n_tiles * tile_cols), jnp.float32),
        grid=(n_tiles,),
        in_specs=[
            pl.BlockSpec((batch, in_dim), lambda t: (0, 0)),        # x (resident)
            pl.BlockSpec((in_dim, tile_cols), lambda t: (0, 0)),    # mu_t (resident)
            pl.BlockSpec((in_dim, tile_cols), lambda t: (0, 0)),    # sigma_t (resident)
            pl.BlockSpec((in_dim, tile_cols), lambda t: (0, t)),    # eps tile
        ],
        out_specs=pl.BlockSpec((batch, tile_cols), lambda t: (0, t)),
        compiler_params=pltpu.CompilerParams(
            dimension_semantics=("parallel",)),
        cost_estimate=cost,
    )(x, mu_t, sigma_t, eps2d)

    # (batch, mc_pad*out_dim) -> (batch, mc_pad, out_dim) -> drop MC padding
    # -> (batch, out_dim, mc_num), matching the PyTorch output layout.
    z = z2d.reshape(batch, mc_pad, out_dim)[:, :mc_num, :]
    z = jnp.transpose(z, (0, 2, 1))
    return z, w_mu, w_p


if __name__ == "__main__":
    in_dim, out_dim = 32, 16
    batch = 8
    mc_num = 100        # default mc_num of the PyTorch forward()

    key = jax.random.PRNGKey(0)
    k_mu, k_p, k_x, k_eps = jax.random.split(key, 4)

    # Parameter init mirroring the PyTorch __init__: w_mu ~ N(0,0.1), w_p ~ N(1,0.001).
    w_mu = 0.1 * jax.random.normal(k_mu, (in_dim, out_dim), dtype=jnp.float32)
    w_p = 1.0 + 0.001 * jax.random.normal(k_p, (in_dim, out_dim), dtype=jnp.float32)

    x = jax.random.normal(k_x, (batch, in_dim), dtype=jnp.float32)
    # MC noise (drawn in the wrapper; the PyTorch module draws it internally with randn).
    eps = jax.random.normal(k_eps, (in_dim, mc_num, out_dim), dtype=jnp.float32)

    z, mu_out, p_out = linear_variational_forward(x, w_mu, w_p, eps)
    jax.block_until_ready(z)

    # Pure-JAX reference with the same eps.
    sigma = jax.nn.softplus(w_p)
    w_all = w_mu[:, None, :] + sigma[:, None, :] * eps            # (in, mc, out)
    z_ref = jnp.einsum("bi,imo->bom", x, w_all)                   # (batch, out, mc)
    assert z.shape == (batch, out_dim, mc_num)
    assert mu_out.shape == (in_dim, out_dim) and p_out.shape == (in_dim, out_dim)
    assert jnp.allclose(z, z_ref, atol=1e-3, rtol=1e-3), float(jnp.max(jnp.abs(z - z_ref)))

    print("KERNEL_OK")
</pallas_src>

<mosaic_0001>
module attributes {stable_mosaic.version = 11 : i64} {
  func.func @_linvar_kernel(%arg0: i32, %arg1: memref<8x32xf32, #tpu.memory_space<vmem>>, %arg2: memref<32x896xf32, #tpu.memory_space<vmem>>, %arg3: memref<32x896xf32, #tpu.memory_space<vmem>>, %arg4: memref<32x896xf32, #tpu.memory_space<vmem>>, %arg5: memref<8x896xf32, #tpu.memory_space<vmem>>) attributes {dimension_semantics = [#tpu.dimension_semantics<parallel>], iteration_bounds = array<i64: 2>, scalar_prefetch = 0 : i64, scratch_operands = 0 : i64, tpu.core_type = #tpu.core_type<tc>, window_params = [{pipeline_mode = #tpu.pipeline_mode<synchronous>, transform_indices = @transform_0, window_bounds = array<i64: 8, 32>}, {pipeline_mode = #tpu.pipeline_mode<synchronous>, transform_indices = @transform_1, window_bounds = array<i64: 32, 896>}, {pipeline_mode = #tpu.pipeline_mode<synchronous>, transform_indices = @transform_2, window_bounds = array<i64: 32, 896>}, {transform_indices = @transform_3, window_bounds = array<i64: 32, 896>}, {transform_indices = @transform_4, window_bounds = array<i64: 8, 896>}]} {
    %c0 = arith.constant 0 : index
    %c0_0 = arith.constant 0 : index
    %0 = vector.load %arg2[%c0, %c0_0] : memref<32x896xf32, #tpu.memory_space<vmem>>, vector<32x896xf32>
    %c0_1 = arith.constant 0 : index
    %c0_2 = arith.constant 0 : index
    %1 = vector.load %arg3[%c0_1, %c0_2] : memref<32x896xf32, #tpu.memory_space<vmem>>, vector<32x896xf32>
    %c0_3 = arith.constant 0 : index
    %c0_4 = arith.constant 0 : index
    %2 = vector.load %arg4[%c0_3, %c0_4] : memref<32x896xf32, #tpu.memory_space<vmem>>, vector<32x896xf32>
    %3 = arith.mulf %1, %2 : vector<32x896xf32>
    %4 = arith.addf %0, %3 : vector<32x896xf32>
    %c0_5 = arith.constant 0 : index
    %c0_6 = arith.constant 0 : index
    %5 = vector.load %arg1[%c0_5, %c0_6] : memref<8x32xf32, #tpu.memory_space<vmem>>, vector<8x32xf32>
    %cst = arith.constant dense<0.000000e+00> : vector<8x896xf32>
    %6 = tpu.matmul %5, %4, %cst {dimension_numbers = #tpu.dot_dimension_numbers<[1], [0], [0], [1], [0, 0, 1, 1], [], []>} : vector<8x32xf32>, vector<32x896xf32>, vector<8x896xf32> -> vector<8x896xf32>
    %c0_7 = arith.constant 0 : index
    %c0_8 = arith.constant 0 : index
    %7 = vector.load %arg5[%c0_7, %c0_8] : memref<8x896xf32, #tpu.memory_space<vmem>>, vector<8x896xf32>
    tpu.vector_store %arg5[%c0_7, %c0_8], %6 {strides = array<i32>} : memref<8x896xf32, #tpu.memory_space<vmem>>, vector<8x896xf32>,
    return
  }
  func.func @transform_0(%arg0: i32) -> (i32, i32) {
    %c0_i32 = arith.constant 0 : i32
    %c0_i32_0 = arith.constant 0 : i32
    %c0_i32_1 = arith.constant 0 : i32
    return %c0_i32, %c0_i32_0 : i32, i32
  }
  func.func @transform_1(%arg0: i32) -> (i32, i32) {
    %c0_i32 = arith.constant 0 : i32
    %c0_i32_0 = arith.constant 0 : i32
    %c0_i32_1 = arith.constant 0 : i32
    return %c0_i32, %c0_i32_0 : i32, i32
  }
  func.func @transform_2(%arg0: i32) -> (i32, i32) {
    %c0_i32 = arith.constant 0 : i32
    %c0_i32_0 = arith.constant 0 : i32
    %c0_i32_1 = arith.constant 0 : i32
    return %c0_i32, %c0_i32_0 : i32, i32
  }
  func.func @transform_3(%arg0: i32) -> (i32, i32) {
    %c0_i32 = arith.constant 0 : i32
    %c0_i32_0 = arith.constant 0 : i32
    return %c0_i32, %arg0 : i32, i32
  }
  func.func @transform_4(%arg0: i32) -> (i32, i32) {
    %c0_i32 = arith.constant 0 : i32
    %c0_i32_0 = arith.constant 0 : i32
    return %c0_i32, %arg0 : i32, i32
  }
}

</mosaic_0001>

<llo_original>
// kernel: tpu_custom_call.1
$region0: #{tpu_custom_call.1}
  #allocation0 [shape = 'u32[]', space=smem, size = 0x4, offset = 0x4, fixed_abs, tag = 'smem constant byte address 0x4 - core index']
  #allocation1 [shape = 'u32[72,128]{1,0:T(1,128)}', space=vmem, size = 0x9000, scoped, tag = 'internal scratch']
  %s0 = inlined_call_operand.hbm [shape: f32[8,32], index: 0, kind: input, shape index: {}]
  %s1 = inlined_call_operand.hbm [shape: f32[32,896], index: 1, kind: input, shape index: {}]
  %s2 = inlined_call_operand.hbm [shape: f32[32,896], index: 2, kind: input, shape index: {}]
  %s3 = inlined_call_operand.hbm [shape: f32[32,1792], index: 3, kind: input, shape index: {}]
  %s4 = inlined_call_operand.hbm [shape: f32[8,1792], index: 4, kind: output, shape index: {}]
  %s5 = sld [smem:[#allocation0]]
  $region65: #{tpu_custom_call.1} parent=0
    _
  %s7 = ssub.s32 1, %s5
  %s8 = scalar_select 0, %s7, %s5
  $region1: #{tpu_custom_call.1} parent=0
    #allocation2 [shape = 'u8[4096]{0}', space=vmem, size = 0x1000, scoped, tag = 'input window, operand 0, single buffered']
    #allocation3 [shape = 's32[2]{0}', space=sflag, size = 0x8, scoped, tag = 'scoped memory for tpu_custom_call.1']
    #allocation4 [shape = 's32[2]{0}', space=sflag, size = 0x8, scoped, tag = 'scoped memory for tpu_custom_call.1']
    #allocation5 [shape = 'u8[114688]{0}', space=vmem, size = 0x1c000, scoped, tag = 'input window, operand 1, single buffered']
    #allocation6 [shape = 's32[1]{0}', space=sflag, size = 0x4, scoped, tag = 'scoped memory for tpu_custom_call.1']
    #allocation7 [shape = 'u8[114688]{0}', space=vmem, size = 0x1c000, scoped, tag = 'input window, operand 2, single buffered']
    #allocation8 [shape = 'u8[229376]{0}', space=vmem, size = 0x38000, scoped, tag = 'input window, operand 3']
    #allocation9 [shape = 's32[2]{0}', space=sflag, size = 0x8, scoped, tag = 'scoped memory for tpu_custom_call.1']
    #allocation10 [shape = 'u8[57344]{0}', space=vmem, size = 0xe000, scoped, tag = 'output window, operand 0']
    %9 = vsyncpa [#allocation3], 0
    %10 = vsyncpa [#allocation6], 0
    %11 = vsyncpa [#allocation9], 0
    %s12 = scalar_lea.sflag [#allocation9], 1
    %13 = vsyncpa %s12, 0
    %14 = vsyncpa [#allocation4], 0
    %s15 = scalar_lea.sflag [#allocation4], 1
    %16 = vsyncpa %s15, 0
    loop: start=0, step=1, limit=4
    $region2: #{tpu_custom_call.1} parent=1 // loop_pre_header
      _
    $region3: #{tpu_custom_call.1} parent=1 // loop_header
      %s18 = sphi 0, %s22
      %p19 = scmp.ge.s32.totalorder %s18, 4
      %s26 = sphi 0, %s26
      %s28 = sphi 0, %s26
      %s29 = sphi 0, %s28
      %s43 = sphi 0, %s29
      %s47 = sphi 0, %s47
      %s49 = sphi 0, %s47
      %s50 = sphi 0, %s49
      %s64 = sphi 0, %s50
      %s68 = sphi 0, %s68
      %s70 = sphi 0, %s68
      %s71 = sphi 0, %s70
      %s85 = sphi 0, %s71
      %s91 = sphi 0, %s93
      %s94 = sphi 0, %s91
      %s95 = sphi 0, %s94
      %s111 = sphi 0, %s95
      %s117 = sphi 0, %s119
      %s120 = sphi 0, %s117
      %s121 = sphi 0, %s120
      %s137 = sphi 0, %s121
    $region4: #{tpu_custom_call.1} parent=1 // loop_header_branch
      %21 = sbr.rel (%p19) target = $region8
    $region5: #{tpu_custom_call.1} parent=1 // loop_body
      %s23 = ssub.s32 %s18, 1
      %s24 = ssub.s32 %s18, 2
      %s25 = sadd.s32 %s18, 1
      %s27 = sadd.s32 %s26, 1
      %p30 = scmp.eq.s32.totalorder %s18, 1
      %p31 = scmp.ne.s32.totalorder %s26, %s28
      %p32 = scmp.eq.s32.totalorder %s18, 0
      %p33 = por %p31, %p32
      %p34 = scmp.ne.s32.totalorder %s26, %s28
      %p35 = scmp.eq.s32.totalorder %s23, 1
      %p36 = por %p34, %p35
      %p37 = scmp.ne.s32.totalorder %s28, %s29
      %p38 = scmp.eq.s32.totalorder %s23, 0
      %p39 = por %p37, %p38
      %p40 = scmp.ne.s32.totalorder %s28, %s29
      %p41 = scmp.eq.s32.totalorder %s24, 1
      %p42 = por %p40, %p41
      %p44 = scmp.ne.s32.totalorder %s29, %s43
      %p45 = scmp.eq.s32.totalorder %s24, 0
      %p46 = por %p44, %p45
      %s48 = sadd.s32 %s47, 1
      %p51 = scmp.eq.s32.totalorder %s18, 1
      %p52 = scmp.ne.s32.totalorder %s47, %s49
      %p53 = scmp.eq.s32.totalorder %s18, 0
      %p54 = por %p52, %p53
      %p55 = scmp.ne.s32.totalorder %s47, %s49
      %p56 = scmp.eq.s32.totalorder %s23, 1
      %p57 = por %p55, %p56
      %p58 = scmp.ne.s32.totalorder %s49, %s50
      %p59 = scmp.eq.s32.totalorder %s23, 0
      %p60 = por %p58, %p59
      %p61 = scmp.ne.s32.totalorder %s49, %s50
      %p62 = scmp.eq.s32.totalorder %s24, 1
      %p63 = por %p61, %p62
      %p65 = scmp.ne.s32.totalorder %s50, %s64
      %p66 = scmp.eq.s32.totalorder %s24, 0
      %p67 = por %p65, %p66
      %s69 = sadd.s32 %s68, 1
      %p72 = scmp.eq.s32.totalorder %s18, 1
      %p73 = scmp.ne.s32.totalorder %s68, %s70
      %p74 = scmp.eq.s32.totalorder %s18, 0
      %p75 = por %p73, %p74
      %p76 = scmp.ne.s32.totalorder %s68, %s70
      %p77 = scmp.eq.s32.totalorder %s23, 1
      %p78 = por %p76, %p77
      %p79 = scmp.ne.s32.totalorder %s70, %s71
      %p80 = scmp.eq.s32.totalorder %s23, 0
      %p81 = por %p79, %p80
      %p82 = scmp.ne.s32.totalorder %s70, %s71
      %p83 = scmp.eq.s32.totalorder %s24, 1
      %p84 = por %p82, %p83
      %p86 = scmp.ne.s32.totalorder %s71, %s85
      %p87 = scmp.eq.s32.totalorder %s24, 0
      %p88 = por %p86, %p87
      %s89 = ssub.s32 %s18, %s25
      %p90 = scmp.eq.s32.totalorder %s89, 0
      %s92 = sadd.s32 %s91, 1
      %s93 = scalar_select %p90, %s91, %s92
      %p96 = pneg %p90
      %p97 = scmp.eq.s32.totalorder %s18, 1
      %p98 = por %p96, %p97
      %p99 = scmp.ne.s32.totalorder %s91, %s94
      %p100 = scmp.eq.s32.totalorder %s18, 0
      %p101 = por %p99, %p100
      %p102 = scmp.ne.s32.totalorder %s91, %s94
      %p103 = scmp.eq.s32.totalorder %s23, 1
      %p104 = por %p102, %p103
      %p105 = scmp.ne.s32.totalorder %s94, %s95
      %p106 = scmp.eq.s32.totalorder %s23, 0
      %p107 = por %p105, %p106
      %p108 = scmp.ne.s32.totalorder %s94, %s95
      %p109 = scmp.eq.s32.totalorder %s24, 1
      %p110 = por %p108, %p109
      %p112 = scmp.ne.s32.totalorder %s95, %s111
      %p113 = scmp.eq.s32.totalorder %s24, 0
      %p114 = por %p112, %p113
      %s115 = ssub.s32 %s18, %s25
      %p116 = scmp.eq.s32.totalorder %s115, 0
      %s118 = sadd.s32 %s117, 1
      %s119 = scalar_select %p116, %s117, %s118
      %p122 = pneg %p116
      %p123 = scmp.eq.s32.totalorder %s18, 1
      %p124 = por %p122, %p123
      %p125 = scmp.ne.s32.totalorder %s117, %s120
      %p126 = scmp.eq.s32.totalorder %s18, 0
      %p127 = por %p125, %p126
      %p128 = scmp.ne.s32.totalorder %s117, %s120
      %p129 = scmp.eq.s32.totalorder %s23, 1
      %p130 = por %p128, %p129
      %p131 = scmp.ne.s32.totalorder %s120, %s121
      %p132 = scmp.eq.s32.totalorder %s23, 0
      %p133 = por %p131, %p132
      %p134 = scmp.ne.s32.totalorder %s120, %s121
      %p135 = scmp.eq.s32.totalorder %s24, 1
      %p136 = por %p134, %p135
      %p138 = scmp.ne.s32.totalorder %s121, %s137
      %p139 = scmp.eq.s32.totalorder %s24, 0
      %p140 = por %p138, %p139
      %p141 = scmp.le.s32.totalorder 1, %s18
      %p142 = scmp.lt.s32.totalorder %s18, 3
      %p143 = pnand %p141, %p142
      %p144 = pneg %p143
      // Predicated region
      $region9: #{tpu_custom_call.1} parent=5 // pred_check
        _
      $region10: #{tpu_custom_call.1} parent=5 // pred_check_branch
        %146 = sbr.rel (%p143) target = $region12
      $region11: #{tpu_custom_call.1} parent=5 // pred_region
        %s147 = ssub.s32 %s18, 1
        // Predicated region
        $region13: #{tpu_custom_call.1} parent=11 // pred_check
          %p148 = pneg %p39
        $region14: #{tpu_custom_call.1} parent=11 // pred_check_branch
          %150 = sbr.rel (%p148) target = $region16
        $region15: #{tpu_custom_call.1} parent=11 // pred_region
          %152 = vsyncadd [#allocation3], 0
          %s154 = sshll.u32 %s0, 4
          %s155 = int_to_ptr.hbm [resolvable:$true] %s154
          %s156 = sshll.u32 [#allocation2], 4
          %s157 = int_to_ptr.vmem [resolvable:$true] %s156
          %159 = dma.hbm_to_vmem [thread:$0]  %s155, 128, %s157, [#allocation3]
        $region16: #{tpu_custom_call.1} parent=11 // pred_fallthru
          _
        // Predicated region
        $region17: #{tpu_custom_call.1} parent=11 // pred_check
          %p160 = pneg %p60
        $region18: #{tpu_custom_call.1} parent=11 // pred_check_branch
          %162 = sbr.rel (%p160) target = $region20
        $region19: #{tpu_custom_call.1} parent=11 // pred_region
          %164 = vsyncadd [#allocation6], 0
          %s165 = sshll.u32 %s1, 4
          %s166 = int_to_ptr.hbm [resolvable:$true] %s165
          %s167 = sshll.u32 [#allocation5], 4
          %s168 = int_to_ptr.vmem [resolvable:$true] %s167
          %173 = dma.hbm_to_vmem [thread:$0]  %s166, 3584, %s168, [#allocation6], 896, 896, 56
        $region20: #{tpu_custom_call.1} parent=11 // pred_fallthru
          _
        // Predicated region
        $region21: #{tpu_custom_call.1} parent=11 // pred_check
          %p174 = pneg %p81
        $region22: #{tpu_custom_call.1} parent=11 // pred_check_branch
          %176 = sbr.rel (%p174) target = $region24
        $region23: #{tpu_custom_call.1} parent=11 // pred_region
          %178 = vsyncadd [#allocation6], 0
          %s179 = sshll.u32 %s2, 4
          %s180 = int_to_ptr.hbm [resolvable:$true] %s179
          %s181 = sshll.u32 [#allocation7], 4
          %s182 = int_to_ptr.vmem [resolvable:$true] %s181
          %187 = dma.hbm_to_vmem [thread:$0]  %s180, 3584, %s182, [#allocation6], 896, 896, 56
        $region24: #{tpu_custom_call.1} parent=11 // pred_fallthru
          _
      $region12: #{tpu_custom_call.1} parent=5 // pred_fallthru
        _
      %p188 = scmp.lt.s32.totalorder %s18, 2
      // Predicated region
      $region25: #{tpu_custom_call.1} parent=5 // pred_check
        %p189 = pneg %p188
      $region26: #{tpu_custom_call.1} parent=5 // pred_check_branch
        %191 = sbr.rel (%p189) target = $region28
      $region27: #{tpu_custom_call.1} parent=5 // pred_region
        // Predicated region
        $region29: #{tpu_custom_call.1} parent=27 // pred_check
          %p192 = pneg %p101
        $region30: #{tpu_custom_call.1} parent=27 // pred_check_branch
          %194 = sbr.rel (%p192) target = $region32
        $region31: #{tpu_custom_call.1} parent=27 // pred_region
          %s195 = sand.u32 %s91, 1
          %s196 = scalar_lea.sflag [#allocation9], %s195
          %s197 = sand.u32 %s91, 1
          %s198 = smul.addr %s197, 224
          %s199 = scalar_lea.vmem [#allocation8], %s198
          %s200 = smul.u32 7, %s18
          %202 = vsyncadd %s196, 0
          %s203 = smul.addr %s200, 8
          %s204 = scalar_lea.hbm %s3, %s203
          %s205 = sshll.u32 %s204, 4
          %s206 = int_to_ptr.hbm [resolvable:$true] %s205
          %s207 = sshll.u32 %s199, 4
          %s208 = int_to_ptr.vmem [resolvable:$true] %s207
          %213 = dma.hbm_to_vmem [thread:$0]  %s206, 3584, %s208, %s196, 1792, 896, 56
        $region32: #{tpu_custom_call.1} parent=27 // pred_fallthru
          _
      $region28: #{tpu_custom_call.1} parent=5 // pred_fallthru
        _
      %p214 = scmp.le.s32.totalorder 1, %s18
      %p215 = scmp.lt.s32.totalorder %s18, 3
      %p216 = pnand %p214, %p215
      %p217 = pneg %p216
      // Predicated region
      $region33: #{tpu_custom_call.1} parent=5 // pred_check
        _
      $region34: #{tpu_custom_call.1} parent=5 // pred_check_branch
        %219 = sbr.rel (%p216) target = $region36
      $region35: #{tpu_custom_call.1} parent=5 // pred_region
        %s220 = ssub.s32 %s18, 1
        // Predicated region
        $region37: #{tpu_custom_call.1} parent=35 // pred_check
          %p221 = pneg %p39
        $region38: #{tpu_custom_call.1} parent=35 // pred_check_branch
          %223 = sbr.rel (%p221) target = $region40
        $region39: #{tpu_custom_call.1} parent=35 // pred_region
          %225 = dma.done [#allocation3], 128
        $region40: #{tpu_custom_call.1} parent=35 // pred_fallthru
          _
        // Predicated region
        $region41: #{tpu_custom_call.1} parent=35 // pred_check
          %p226 = pneg %p60
        $region42: #{tpu_custom_call.1} parent=35 // pred_check_branch
          %228 = sbr.rel (%p226) target = $region44
        $region43: #{tpu_custom_call.1} parent=35 // pred_region
          %230 = dma.done [#allocation6], 3584
        $region44: #{tpu_custom_call.1} parent=35 // pred_fallthru
          _
        // Predicated region
        $region45: #{tpu_custom_call.1} parent=35 // pred_check
          %p231 = pneg %p81
        $region46: #{tpu_custom_call.1} parent=35 // pred_check_branch
          %233 = sbr.rel (%p231) target = $region48
        $region47: #{tpu_custom_call.1} parent=35 // pred_region
          %235 = dma.done [#allocation6], 3584
        $region48: #{tpu_custom_call.1} parent=35 // pred_fallthru
          _
        %s236 = sand.u32 %s94, 1
        %s237 = scalar_lea.sflag [#allocation9], %s236
        %s238 = sand.u32 %s94, 1
        %s239 = smul.addr %s238, 224
        %s240 = scalar_lea.vmem [#allocation8], %s239
        // Predicated region
        $region49: #{tpu_custom_call.1} parent=35 // pred_check
          %p241 = pneg %p107
        $region50: #{tpu_custom_call.1} parent=35 // pred_check_branch
          %243 = sbr.rel (%p241) target = $region52
        $region51: #{tpu_custom_call.1} parent=35 // pred_region
          %245 = dma.done %s237, 3584
        $region52: #{tpu_custom_call.1} parent=35 // pred_fallthru
          _
        %p246 = pneg %p39
        %p247 = pneg %p36
        %p248 = pneg %p60
        %p249 = pneg %p57
        %p250 = pneg %p81
        %p251 = pneg %p78
        %s252 = sand.u32 %s94, 1
        %s253 = scalar_lea.sflag [#allocation9], %s252
        %s254 = sand.u32 %s94, 1
        %s255 = smul.addr %s254, 224
        %s256 = scalar_lea.vmem [#allocation8], %s255
        %p257 = pneg %p107
        %p258 = pneg %p104
        %p259 = pneg %p133
        %p260 = pneg %p130
        %s261 = sand.u32 %s120, 1
        %s262 = scalar_lea.sflag [#allocation4], %s261
        %s263 = sand.u32 %s120, 1
        %s264 = smul.addr %s263, 56
        %s265 = scalar_lea.vmem [#allocation10], %s264
        %s266 = smul.u32 7, %s23
        %s267 = smul.u32 7, %s23
        %v268 = vld [vmem:[#allocation5] sm:$0xff]
        %v269 = vld [vmem:[#allocation5 + $0x8] sm:$0xff]
        %v270 = vld [vmem:[#allocation5 + $0x10] sm:$0xff]
        %v271 = vld [vmem:[#allocation5 + $0x18] sm:$0xff]
        %v272 = vld [vmem:[#allocation5 + $0x20] sm:$0xff]
        %v273 = vld [vmem:[#allocation5 + $0x28] sm:$0xff]
        %v274 = vld [vmem:[#allocation5 + $0x30] sm:$0xff]
        %v275 = vld [vmem:[#allocation5 + $0x38] sm:$0xff]
        %v276 = vld [vmem:[#allocation5 + $0x40] sm:$0xff]
        %v277 = vld [vmem:[#allocation5 + $0x48] sm:$0xff]
        %v278 = vld [vmem:[#allocation5 + $0x50] sm:$0xff]
        %v279 = vld [vmem:[#allocation5 + $0x58] sm:$0xff]
        %v280 = vld [vmem:[#allocation5 + $0x60] sm:$0xff]
        %v281 = vld [vmem:[#allocation5 + $0x68] sm:$0xff]
        %v282 = vld [vmem:[#allocation5 + $0x70] sm:$0xff]
        %v283 = vld [vmem:[#allocation5 + $0x78] sm:$0xff]
        %v284 = vld [vmem:[#allocation5 + $0x80] sm:$0xff]
        %v285 = vld [vmem:[#allocation5 + $0x88] sm:$0xff]
        %v286 = vld [vmem:[#allocation5 + $0x90] sm:$0xff]
        %v287 = vld [vmem:[#allocation5 + $0x98] sm:$0xff]
        %v288 = vld [vmem:[#allocation5 + $0xa0] sm:$0xff]
        %v289 = vld [vmem:[#allocation5 + $0xa8] sm:$0xff]
        %v290 = vld [vmem:[#allocation5 + $0xb0] sm:$0xff]
        %v291 = vld [vmem:[#allocation5 + $0xb8] sm:$0xff]
        %v292 = vld [vmem:[#allocation5 + $0xc0] sm:$0xff]
        %v293 = vld [vmem:[#allocation5 + $0xc8] sm:$0xff]
        %v294 = vld [vmem:[#allocation5 + $0xd0] sm:$0xff]
        %v295 = vld [vmem:[#allocation5 + $0xd8] sm:$0xff]
        %v296 = vld [vmem:[#allocation7] sm:$0xff]
        %v297 = vld [vmem:[#allocation7 + $0x8] sm:$0xff]
        %v298 = vld [vmem:[#allocation7 + $0x10] sm:$0xff]
        %v299 = vld [vmem:[#allocation7 + $0x18] sm:$0xff]
        %v300 = vld [vmem:[#allocation7 + $0x20] sm:$0xff]
        %v301 = vld [vmem:[#allocation7 + $0x28] sm:$0xff]
        %v302 = vld [vmem:[#allocation7 + $0x30] sm:$0xff]
        %v303 = vld [vmem:[#allocation7 + $0x38] sm:$0xff]
        %v304 = vld [vmem:[#allocation7 + $0x40] sm:$0xff]
        %v305 = vld [vmem:[#allocation7 + $0x48] sm:$0xff]
        %v306 = vld [vmem:[#allocation7 + $0x50] sm:$0xff]
        %v307 = vld [vmem:[#allocation7 + $0x58] sm:$0xff]
        %v308 = vld [vmem:[#allocation7 + $0x60] sm:$0xff]
        %v309 = vld [vmem:[#allocation7 + $0x68] sm:$0xff]
        %v310 = vld [vmem:[#allocation7 + $0x70] sm:$0xff]
        %v311 = vld [vmem:[#allocation7 + $0x78] sm:$0xff]
        %v312 = vld [vmem:[#allocation7 + $0x80] sm:$0xff]
        %v313 = vld [vmem:[#allocation7 + $0x88] sm:$0xff]
        %v314 = vld [vmem:[#allocation7 + $0x90] sm:$0xff]
        %v315 = vld [vmem:[#allocation7 + $0x98] sm:$0xff]
        %v316 = vld [vmem:[#allocation7 + $0xa0] sm:$0xff]
        %v317 = vld [vmem:[#allocation7 + $0xa8] sm:$0xff]
        %v318 = vld [vmem:[#allocation7 + $0xb0] sm:$0xff]
        %v319 = vld [vmem:[#allocation7 + $0xb8] sm:$0xff]
        %v320 = vld [vmem:[#allocation7 + $0xc0] sm:$0xff]
        %v321 = vld [vmem:[#allocation7 + $0xc8] sm:$0xff]
        %v322 = vld [vmem:[#allocation7 + $0xd0] sm:$0xff]
        %v323 = vld [vmem:[#allocation7 + $0xd8] sm:$0xff]
        %v324 = vld [vmem:[%s240] sm:$0xff]
        %v325 = vld [vmem:[%s240 + $0x8] sm:$0xff]
        %v326 = vld [vmem:[%s240 + $0x10] sm:$0xff]
        %v327 = vld [vmem:[%s240 + $0x18] sm:$0xff]
        %v328 = vld [vmem:[%s240 + $0x20] sm:$0xff]
        %v329 = vld [vmem:[%s240 + $0x28] sm:$0xff]
        %v330 = vld [vmem:[%s240 + $0x30] sm:$0xff]
        %v331 = vld [vmem:[%s240 + $0x38] sm:$0xff]
        %v332 = vld [vmem:[%s240 + $0x40] sm:$0xff]
        %v333 = vld [vmem:[%s240 + $0x48] sm:$0xff]
        %v334 = vld [vmem:[%s240 + $0x50] sm:$0xff]
        %v335 = vld [vmem:[%s240 + $0x58] sm:$0xff]
        %v336 = vld [vmem:[%s240 + $0x60] sm:$0xff]
        %v337 = vld [vmem:[%s240 + $0x68] sm:$0xff]
        %v338 = vld [vmem:[%s240 + $0x70] sm:$0xff]
        %v339 = vld [vmem:[%s240 + $0x78] sm:$0xff]
        %v340 = vld [vmem:[%s240 + $0x80] sm:$0xff]
        %v341 = vld [vmem:[%s240 + $0x88] sm:$0xff]
        %v342 = vld [vmem:[%s240 + $0x90] sm:$0xff]
        %v343 = vld [vmem:[%s240 + $0x98] sm:$0xff]
        %v344 = vld [vmem:[%s240 + $0xa0] sm:$0xff]
        %v345 = vld [vmem:[%s240 + $0xa8] sm:$0xff]
        %v346 = vld [vmem:[%s240 + $0xb0] sm:$0xff]
        %v347 = vld [vmem:[%s240 + $0xb8] sm:$0xff]
        %v348 = vld [vmem:[%s240 + $0xc0] sm:$0xff]
        %v349 = vld [vmem:[%s240 + $0xc8] sm:$0xff]
        %v350 = vld [vmem:[%s240 + $0xd0] sm:$0xff]
        %v351 = vld [vmem:[%s240 + $0xd8] sm:$0xff]
        %v352 = vmul.f32 %v296, %v324
        %v353 = vmul.f32 %v297, %v325
        %v354 = vmul.f32 %v298, %v326
        %v355 = vmul.f32 %v299, %v327
        %v356 = vmul.f32 %v300, %v328
        %v357 = vmul.f32 %v301, %v329
        %v358 = vmul.f32 %v302, %v330
        %v359 = vmul.f32 %v303, %v331
        %v360 = vmul.f32 %v304, %v332
        %v361 = vmul.f32 %v305, %v333
        %v362 = vmul.f32 %v306, %v334
        %v363 = vmul.f32 %v307, %v335
        %v364 = vmul.f32 %v308, %v336
        %v365 = vmul.f32 %v309, %v337
        %v366 = vmul.f32 %v310, %v338
        %v367 = vmul.f32 %v311, %v339
        %v368 = vmul.f32 %v312, %v340
        %v369 = vmul.f32 %v313, %v341
        %v370 = vmul.f32 %v314, %v342
        %v371 = vmul.f32 %v315, %v343
        %v372 = vmul.f32 %v316, %v344
        %v373 = vmul.f32 %v317, %v345
        %v374 = vmul.f32 %v318, %v346
        %v375 = vmul.f32 %v319, %v347
        %v376 = vmul.f32 %v320, %v348
        %v377 = vmul.f32 %v321, %v349
        %v378 = vmul.f32 %v322, %v350
        %v379 = vmul.f32 %v323, %v351
        %v380 = vadd.f32 %v268, %v352
        %v381 = vadd.f32 %v269, %v353
        %v382 = vadd.f32 %v270, %v354
        %v383 = vadd.f32 %v271, %v355
        %v384 = vadd.f32 %v272, %v356
        %v385 = vadd.f32 %v273, %v357
        %v386 = vadd.f32 %v274, %v358
        %v387 = vadd.f32 %v275, %v359
        %v388 = vadd.f32 %v276, %v360
        %v389 = vadd.f32 %v277, %v361
        %v390 = vadd.f32 %v278, %v362
        %v391 = vadd.f32 %v279, %v363
        %v392 = vadd.f32 %v280, %v364
        %v393 = vadd.f32 %v281, %v365
        %v394 = vadd.f32 %v282, %v366
        %v395 = vadd.f32 %v283, %v367
        %v396 = vadd.f32 %v284, %v368
        %v397 = vadd.f32 %v285, %v369
        %v398 = vadd.f32 %v286, %v370
        %v399 = vadd.f32 %v287, %v371
        %v400 = vadd.f32 %v288, %v372
        %v401 = vadd.f32 %v289, %v373
        %v402 = vadd.f32 %v290, %v374
        %v403 = vadd.f32 %v291, %v375
        %v404 = vadd.f32 %v292, %v376
        %v405 = vadd.f32 %v293, %v377
        %v406 = vadd.f32 %v294, %v378
        %v407 = vadd.f32 %v295, %v379
        %v408 = vld [vmem:[#allocation2] sm:$0xff]
        %vm409 = vcmask 261120
        %v411 = vsel %vm409, %v408, 0
        %413 = vmatpush.msra.mxu0 0.0
        %414 = vmatpush.msra.mxu0 0.0
        %415 = vmatpush.msra.mxu0 0.0
        %416 = vmatpush.msra.mxu0 0.0
        %417 = vmatpush.msra.mxu0 0.0
        %418 = vmatpush.msra.mxu0 0.0
        %419 = vmatpush.msra.mxu0 0.0
        %420 = vmatpush.msra.mxu0 0.0
        %421 = vmatpush.msra.mxu0 0.0
        %422 = vmatpush.msra.mxu0 0.0
        %423 = vmatpush.msra.mxu0 0.0
        %424 = vmatpush.msra.mxu0 0.0
        %425 = vmatpush.msra.mxu0 %v401
        %426 = vmatpush.msra.mxu0 %v394
        %427 = vmatpush.msra.mxu0 %v387
        %428 = vmatpush.msra.mxu0 %v380
        %429 = vmatmul.f32.gmra.mxu0 %v411
        %v430 = vpop.f32.mrf.mxu0
        %v431 = vadd.f32 0.0, %v430
        %432 = vdwg.mxu0
        %433 = vmatpush.msra.mxu0 0.0
        %434 = vmatpush.msra.mxu0 0.0
        %435 = vmatpush.msra.mxu0 0.0
        %436 = vmatpush.msra.mxu0 0.0
        %437 = vmatpush.msra.mxu0 0.0
        %438 = vmatpush.msra.mxu0 0.0
        %439 = vmatpush.msra.mxu0 0.0
        %440 = vmatpush.msra.mxu0 0.0
        %441 = vmatpush.msra.mxu0 0.0
        %442 = vmatpush.msra.mxu0 0.0
        %443 = vmatpush.msra.mxu0 0.0
        %444 = vmatpush.msra.mxu0 0.0
        %445 = vmatpush.msra.mxu0 %v402
        %446 = vmatpush.msra.mxu0 %v395
        %447 = vmatpush.msra.mxu0 %v388
        %448 = vmatpush.msra.mxu0 %v381
        %449 = vmatmul.f32.gmra.mxu0 %v411
        %v450 = vpop.f32.mrf.mxu0
        %v451 = vadd.f32 0.0, %v450
        %452 = vdwg.mxu0
        %453 = vmatpush.msra.mxu0 0.0
        %454 = vmatpush.msra.mxu0 0.0
        %455 = vmatpush.msra.mxu0 0.0
        %456 = vmatpush.msra.mxu0 0.0
        %457 = vmatpush.msra.mxu0 0.0
        %458 = vmatpush.msra.mxu0 0.0
        %459 = vmatpush.msra.mxu0 0.0
        %460 = vmatpush.msra.mxu0 0.0
        %461 = vmatpush.msra.mxu0 0.0
        %462 = vmatpush.msra.mxu0 0.0
        %463 = vmatpush.msra.mxu0 0.0
        %464 = vmatpush.msra.mxu0 0.0
        %465 = vmatpush.msra.mxu0 %v403
        %466 = vmatpush.msra.mxu0 %v396
        %467 = vmatpush.msra.mxu0 %v389
        %468 = vmatpush.msra.mxu0 %v382
        %469 = vmatmul.f32.gmra.mxu0 %v411
        %v470 = vpop.f32.mrf.mxu0
        %v471 = vadd.f32 0.0, %v470
        %472 = vdwg.mxu0
        %473 = vmatpush.msra.mxu0 0.0
        %474 = vmatpush.msra.mxu0 0.0
        %475 = vmatpush.msra.mxu0 0.0
        %476 = vmatpush.msra.mxu0 0.0
        %477 = vmatpush.msra.mxu0 0.0
        %478 = vmatpush.msra.mxu0 0.0
        %479 = vmatpush.msra.mxu0 0.0
        %480 = vmatpush.msra.mxu0 0.0
        %481 = vmatpush.msra.mxu0 0.0
        %482 = vmatpush.msra.mxu0 0.0
        %483 = vmatpush.msra.mxu0 0.0
        %484 = vmatpush.msra.mxu0 0.0
        %485 = vmatpush.msra.mxu0 %v404
        %486 = vmatpush.msra.mxu0 %v397
        %487 = vmatpush.msra.mxu0 %v390
        %488 = vmatpush.msra.mxu0 %v383
        %489 = vmatmul.f32.gmra.mxu0 %v411
        %v490 = vpop.f32.mrf.mxu0
        %v491 = vadd.f32 0.0, %v490
        %492 = vdwg.mxu0
        %493 = vmatpush.msra.mxu0 0.0
        %494 = vmatpush.msra.mxu0 0.0
        %495 = vmatpush.msra.mxu0 0.0
        %496 = vmatpush.msra.mxu0 0.0
        %497 = vmatpush.msra.mxu0 0.0
        %498 = vmatpush.msra.mxu0 0.0
        %499 = vmatpush.msra.mxu0 0.0
        %500 = vmatpush.msra.mxu0 0.0
        %501 = vmatpush.msra.mxu0 0.0
        %502 = vmatpush.msra.mxu0 0.0
        %503 = vmatpush.msra.mxu0 0.0
        %504 = vmatpush.msra.mxu0 0.0
        %505 = vmatpush.msra.mxu0 %v405
        %506 = vmatpush.msra.mxu0 %v398
        %507 = vmatpush.msra.mxu0 %v391
        %508 = vmatpush.msra.mxu0 %v384
        %509 = vmatmul.f32.gmra.mxu0 %v411
        %v510 = vpop.f32.mrf.mxu0
        %v511 = vadd.f32 0.0, %v510
        %512 = vdwg.mxu0
        %513 = vmatpush.msra.mxu0 0.0
        %514 = vmatpush.msra.mxu0 0.0
        %515 = vmatpush.msra.mxu0 0.0
        %516 = vmatpush.msra.mxu0 0.0
        %517 = vmatpush.msra.mxu0 0.0
        %518 = vmatpush.msra.mxu0 0.0
        %519 = vmatpush.msra.mxu0 0.0
        %520 = vmatpush.msra.mxu0 0.0
        %521 = vmatpush.msra.mxu0 0.0
        %522 = vmatpush.msra.mxu0 0.0
        %523 = vmatpush.msra.mxu0 0.0
        %524 = vmatpush.msra.mxu0 0.0
        %525 = vmatpush.msra.mxu0 %v406
        %526 = vmatpush.msra.mxu0 %v399
        %527 = vmatpush.msra.mxu0 %v392
        %528 = vmatpush.msra.mxu0 %v385
        %529 = vmatmul.f32.gmra.mxu0 %v411
        %v530 = vpop.f32.mrf.mxu0
        %v531 = vadd.f32 0.0, %v530
        %532 = vdwg.mxu0
        %533 = vmatpush.msra.mxu0 0.0
        %534 = vmatpush.msra.mxu0 0.0
        %535 = vmatpush.msra.mxu0 0.0
        %536 = vmatpush.msra.mxu0 0.0
        %537 = vmatpush.msra.mxu0 0.0
        %538 = vmatpush.msra.mxu0 0.0
        %539 = vmatpush.msra.mxu0 0.0
        %540 = vmatpush.msra.mxu0 0.0
        %541 = vmatpush.msra.mxu0 0.0
        %542 = vmatpush.msra.mxu0 0.0
        %543 = vmatpush.msra.mxu0 0.0
        %544 = vmatpush.msra.mxu0 0.0
        %545 = vmatpush.msra.mxu0 %v407
        %546 = vmatpush.msra.mxu0 %v400
        %547 = vmatpush.msra.mxu0 %v393
        %548 = vmatpush.msra.mxu0 %v386
        %549 = vmatmul.f32.gmra.mxu0 %v411
        %v550 = vpop.f32.mrf.mxu0
        %v551 = vadd.f32 0.0, %v550
        %552 = vdwg.mxu0
        %553 = vst [vmem:[%s265] sm:$0xff] %v431
        %554 = vst [vmem:[%s265 + $0x8] sm:$0xff] %v451
        %555 = vst [vmem:[%s265 + $0x10] sm:$0xff] %v471
        %556 = vst [vmem:[%s265 + $0x18] sm:$0xff] %v491
        %557 = vst [vmem:[%s265 + $0x20] sm:$0xff] %v511
        %558 = vst [vmem:[%s265 + $0x28] sm:$0xff] %v531
        %559 = vst [vmem:[%s265 + $0x30] sm:$0xff] %v551
        %s560 = sand.u32 %s120, 1
        %s561 = scalar_lea.sflag [#allocation4], %s560
        %s562 = sand.u32 %s120, 1
        %s563 = smul.addr %s562, 56
        %s564 = scalar_lea.vmem [#allocation10], %s563
        // Predicated region
        $region53: #{tpu_custom_call.1} parent=35 // pred_check
          %p565 = pneg %p130
        $region54: #{tpu_custom_call.1} parent=35 // pred_check_branch
          %567 = sbr.rel (%p565) target = $region56
        $region55: #{tpu_custom_call.1} parent=35 // pred_region
          %s568 = smul.u32 7, %s23
          %570 = vsyncadd %s561, 0
          %s571 = smul.addr %s568, 8
          %s572 = scalar_lea.hbm %s4, %s571
          %s574 = sshll.u32 %s564, 4
          %s575 = int_to_ptr.vmem [resolvable:$true] %s574
          %s576 = sshll.u32 %s572, 4
          %s577 = int_to_ptr.hbm [resolvable:$true] %s576
          %579 = dma.vmem_to_hbm [thread:$0]  %s575, 896, %s577, %s561
        $region56: #{tpu_custom_call.1} parent=35 // pred_fallthru
          _
      $region36: #{tpu_custom_call.1} parent=5 // pred_fallthru
        _
      %p580 = scmp.le.s32.totalorder 2, %s18
      // Predicated region
      $region57: #{tpu_custom_call.1} parent=5 // pred_check
        %p581 = pneg %p580
      $region58: #{tpu_custom_call.1} parent=5 // pred_check_branch
        %583 = sbr.rel (%p581) target = $region60
      $region59: #{tpu_custom_call.1} parent=5 // pred_region
        %s584 = ssub.s32 %s18, 2
        // Predicated region
        $region61: #{tpu_custom_call.1} parent=59 // pred_check
          %p585 = pneg %p136
        $region62: #{tpu_custom_call.1} parent=59 // pred_check_branch
          %587 = sbr.rel (%p585) target = $region64
        $region63: #{tpu_custom_call.1} parent=59 // pred_region
          %s588 = sand.u32 %s121, 1
          %s589 = scalar_lea.sflag [#allocation4], %s588
          %s590 = sand.u32 %s121, 1
          %s591 = smul.addr %s590, 56
          %s592 = scalar_lea.vmem [#allocation10], %s591
          %594 = dma.done %s589, 896
        $region64: #{tpu_custom_call.1} parent=59 // pred_fallthru
          _
      $region60: #{tpu_custom_call.1} parent=5 // pred_fallthru
        _
    $region6: #{tpu_custom_call.1} parent=1 // loop_footer
      %s22 = sadd.s32 1, %s18
    $region7: #{tpu_custom_call.1} parent=1 // loop_footer_branch
      %17 = sbr.rel target = $region3
    $region8: #{tpu_custom_call.1} parent=1 // loop_exit
      _
    %595 = vsyncpa [#allocation3], 1
    %s596 = scalar_lea.sflag [#allocation3], 1
    %597 = vsyncpa %s596, 1
    %598 = vsyncpa [#allocation6], 1
    %599 = vsyncpa [#allocation9], 1
    %s600 = scalar_lea.sflag [#allocation9], 1
    %601 = vsyncpa %s600, 1
    %602 = vsyncpa [#allocation4], 1
    %s603 = scalar_lea.sflag [#allocation4], 1
    %604 = vsyncpa %s603, 1

</llo_original>
